<compile_context>
chip_gen: v5e
topology: v5e:2x2
jax: 0.10.0
libtpu: 0.0.40
codegen_flags: <defaults>
</compile_context>

<pallas_src>
import math
import re
from functools import partial

import jax
import jax.numpy as jnp
from jax.experimental import pallas as pl
from jax.experimental.pallas import tpu as pltpu

# ---- model config (small, consistent with Informer(input_dim, output_dim, ...)) ----
INPUT_DIM = 16
OUTPUT_DIM = 8
OUT_PAD = 128      # lane-dense padded output width (multiple of 128)
D_MODEL = 32
N_HEADS = 4        # heads fold back together since attention output == V at L==1
E_LAYERS = 2
D_FF = 64
LN_EPS = 1e-5      # torch.nn.LayerNorm default

# ---- packed parameter-bank row layout ----
# vecs32 (width D_MODEL): [B0, b_vo, per-layer {c2b, ln1g, ln1b, ln2g, ln2b}, lng, lnb]
ROW_B0 = 0
ROW_BVO = 1


def _layer_base(l):
    return 2 + 5 * l


ROW_LNG = 2 + 5 * E_LAYERS
ROW_LNB = ROW_LNG + 1
N_ROWS32 = ROW_LNB + 1
# vecs64 (width D_FF): [c1b_0 .. c1b_{L-1}, b1]
ROW_B1 = E_LAYERS
N_ROWS64 = E_LAYERS + 1


# -------------------- in-kernel math helpers --------------------
def _gelu_tanh(x):
    # tanh-approximation GELU: 0.5*x*(1+tanh(sqrt(2/pi)*(x+0.044715*x^3))).
    # ~7 VALU ops + 1 EUP tanh vs ~18 VALU ops for the erf polynomial.
    # |err| vs torch's exact erf GELU is ~3e-4 per activation (documented in the
    # correctness check below).
    c0 = 0.7978845608028654   # sqrt(2/pi)
    c1 = 0.044715
    x3 = x * x * x
    t = jnp.tanh(c0 * (x + c1 * x3))
    return 0.5 * x * (1.0 + t)


def _layer_norm(h, gamma, beta):
    # Statistics in f32 for numerical safety (cheap (TB,1)/(TB,D) reductions);
    # scale/shift run in the compute dtype (bf16 on v6e/v7x).
    hf = h.astype(jnp.float32)
    mu = jnp.mean(hf, axis=-1, keepdims=True)
    d = hf - mu
    var = jnp.mean(d * d, axis=-1, keepdims=True)
    inv = jax.lax.rsqrt(var + LN_EPS)
    return (d * inv).astype(h.dtype) * gamma + beta


# -------------------- Pallas kernel --------------------
def informer_kernel(x_ref, w0_ref, wvo_ref, c1w_ref, c2w_ref, w1_ref, w2_ref,
                    vecs32_ref, vecs64_ref, b2_ref, out_ref, *, compute_dtype):
    f32 = jnp.float32
    cdt = compute_dtype

    def r32(r):              # (1, D_MODEL) row of the packed 32-wide bank
        return vecs32_ref[r:r + 1, :]

    def r64(r):              # (1, D_FF) row of the packed 64-wide bank
        return vecs64_ref[r:r + 1, :]

    def mm(a, w):            # MXU matmul, f32 accumulation, result in compute dtype
        return jnp.dot(a, w, preferred_element_type=f32).astype(cdt)

    x = x_ref[...].astype(cdt)

    # Encoder: E_LAYERS EncoderLayers.  At seq_len == 1 the ProbAttention output
    # equals V, so attention + residual collapses to x @ (I + Wv@Wo) + b (fused
    # in the wrapper); the input projection is folded into layer 0 (W0 / B0).
    # TODO(synk): Q/K projections and prob top-k sampling are mathematically
    # inert at seq_len==1 and are therefore not materialized in the kernel.
    for l in range(E_LAYERS):
        base = _layer_base(l)
        if l == 0:
            x = mm(x, w0_ref[...]) + r32(ROW_B0)     # input_proj + attention + residual
        else:
            x = mm(x, wvo_ref[...]) + r32(ROW_BVO)   # attention + residual (folded)
        x = _layer_norm(x, r32(base + 1), r32(base + 2))           # norm1

        y = _gelu_tanh(mm(x, c1w_ref[l]) + r64(l))                 # conv1 (k=1) + GELU
        y = mm(y, c2w_ref[l]) + r32(base + 0)                      # conv2 (k=1)
        x = _layer_norm(x + y, r32(base + 3), r32(base + 4))       # norm2

    # encoder final LayerNorm(d_model)
    x = _layer_norm(x, r32(ROW_LNG), r32(ROW_LNB))

    # output head: Linear(d_model, d_ff) -> GELU -> Dropout(eval: identity)
    # -> Linear(d_ff, out).  Head weights are zero-padded to OUT_PAD lanes so the
    # store is a full (TB, 128) unmasked block.
    h = _gelu_tanh(mm(x, w1_ref[...]) + r64(ROW_B1))
    out_ref[...] = (jnp.dot(h, w2_ref[...], preferred_element_type=f32)
                    + b2_ref[...]).astype(out_ref.dtype)


# -------------------- wrapper helpers --------------------
def _round_up(v, m):
    return ((v + m - 1) // m) * m


def _tpu_generation():
    """Best-effort TPU generation from device_kind; 0 if unknown (=> safe f32 path)."""
    try:
        kind = jax.devices()[0].device_kind
        m = re.search(r"(\d+)", kind)
        return int(m.group(1)) if m else 0
    except Exception:
        return 0


def _pack_params(params, dtype):
    """Algebraic fusions + packing the many small tensors into a few arrays."""
    f32 = jnp.float32
    eye = jnp.eye(D_MODEL, dtype=f32)
    # Shared AttentionLayer (one object for every EncoderLayer in the module).
    # At L==1: attention output == V, so attention + residual == x @ (I + WvWo) + b.
    w_vo = eye + params["w_v"] @ params["w_o"]
    b_vo = params["b_v"] @ params["w_o"] + params["b_o"]
    # Fold the input projection into layer-0's fused attention weight.
    w0 = params["w_in"] @ w_vo
    b0 = params["b_in"] @ w_vo + b_vo

    rows32 = [None] * N_ROWS32
    rows32[ROW_B0] = b0
    rows32[ROW_BVO] = b_vo
    for l in range(E_LAYERS):
        base = _layer_base(l)
        rows32[base + 0] = params["c2b"][l]
        rows32[base + 1] = params["ln1g"][l]
        rows32[base + 2] = params["ln1b"][l]
        rows32[base + 3] = params["ln2g"][l]
        rows32[base + 4] = params["ln2b"][l]
    rows32[ROW_LNG] = params["lng"]
    rows32[ROW_LNB] = params["lnb"]
    vecs32 = jnp.concatenate(rows32, axis=0)                      # (14, D_MODEL)

    rows64 = [params["c1b"][l] for l in range(E_LAYERS)] + [params["b1"]]
    vecs64 = jnp.concatenate(rows64, axis=0)                      # (3, D_FF)

    # Lane-dense padded head: real OUTPUT_DIM columns sliced in the wrapper.
    w2p = jnp.zeros((D_FF, OUT_PAD), f32).at[:, :OUTPUT_DIM].set(params["w2"])
    b2p = jnp.zeros((1, OUT_PAD), f32).at[:, :OUTPUT_DIM].set(params["b2"])

    weights = [w0, w_vo, params["c1w"], params["c2w"], params["w1"], w2p,
               vecs32, vecs64, b2p]
    return [w.astype(dtype) for w in weights]


def informer_forward(x, params, *, compute_dtype=None):
    x = x.astype(jnp.float32)
    B = x.shape[0]
    gen = _tpu_generation()
    if compute_dtype is None:
        # bf16 VPU/EUP exist on v6e / v7x; v5e (no bf16 VPU) and unknown stay f32.
        compute_dtype = jnp.bfloat16 if gen >= 6 else jnp.float32
    num_cores = 2 if gen >= 7 else 1       # v7x has 2 TensorCores per chip

    # Batch tile: 8-row (f32 sublane) granularity; split real rows across cores
    # for small B; cap for large B (per-step overhead ~0.35us; TB=2048 of f32
    # activations stays far under v7x's 64 MiB VMEM).
    TB = min(2048, _round_up(max(1, -(-B // num_cores)), 8))
    n_steps = -(-B // TB)
    if num_cores > 1:
        # Even step count so both v7x cores get equal tile counts; on single-TC
        # chips no dead zero tile is added (grid steps are sequential there).
        n_steps = _round_up(n_steps, num_cores)
    B_pad = n_steps * TB
    if B_pad == B:
        x_pad = x
    else:
        x_pad = jnp.zeros((B_pad, INPUT_DIM), jnp.float32).at[:B].set(x)

    weights = _pack_params(params, compute_dtype)

    def full_spec(a):
        nd = a.ndim
        return pl.BlockSpec(a.shape, lambda i, _nd=nd: (0,) * _nd)

    in_specs = ([pl.BlockSpec((TB, INPUT_DIM), lambda i: (i, 0))]
                + [full_spec(w) for w in weights])
    out_spec = pl.BlockSpec((TB, OUT_PAD), lambda i: (i, 0))

    out_padded = pl.pallas_call(
        partial(informer_kernel, compute_dtype=compute_dtype),
        out_shape=jax.ShapeDtypeStruct((B_pad, OUT_PAD), jnp.float32),
        grid=(n_steps,),
        in_specs=in_specs,
        out_specs=out_spec,
        compiler_params=pltpu.CompilerParams(dimension_semantics=("parallel",)),
    )(x_pad, *weights)

    return out_padded[:B, :OUTPUT_DIM]


# -------------------- deterministic synthetic parameters --------------------
def init_params(key):
    ks = jax.random.split(key, 20)

    def w(k, shape, scale=0.05):
        return (scale * jax.random.normal(k, shape)).astype(jnp.float32)

    return {
        # input_projection: Linear(input_dim, d_model)
        "w_in": w(ks[0], (INPUT_DIM, D_MODEL)), "b_in": w(ks[1], (1, D_MODEL)),
        # shared AttentionLayer: value_projection / out_projection (d_model x d_model)
        "w_v": w(ks[2], (D_MODEL, D_MODEL)), "b_v": w(ks[3], (1, D_MODEL)),
        "w_o": w(ks[4], (D_MODEL, D_MODEL)), "b_o": w(ks[5], (1, D_MODEL)),
        # per-EncoderLayer Conv1d(k=1) weights, stacked on a layer axis
        "c1w": w(ks[6], (E_LAYERS, D_MODEL, D_FF)), "c1b": w(ks[7], (E_LAYERS, 1, D_FF)),
        "c2w": w(ks[8], (E_LAYERS, D_FF, D_MODEL)), "c2b": w(ks[9], (E_LAYERS, 1, D_MODEL)),
        # per-EncoderLayer LayerNorms
        "ln1g": 1.0 + w(ks[10], (E_LAYERS, 1, D_MODEL)), "ln1b": w(ks[11], (E_LAYERS, 1, D_MODEL)),
        "ln2g": 1.0 + w(ks[12], (E_LAYERS, 1, D_MODEL)), "ln2b": w(ks[13], (E_LAYERS, 1, D_MODEL)),
        # encoder final LayerNorm
        "lng": 1.0 + w(ks[14], (1, D_MODEL)), "lnb": w(ks[15], (1, D_MODEL)),
        # output head
        "w1": w(ks[16], (D_MODEL, D_FF)), "b1": w(ks[17], (1, D_FF)),
        "w2": w(ks[18], (D_FF, OUTPUT_DIM)), "b2": w(ks[19], (1, OUTPUT_DIM)),
    }


# -------------------- pure-JAX references (for correctness checks) --------------------
def _gelu_erf_ref(v):       # torch's default (exact) GELU
    return 0.5 * v * (1.0 + jax.scipy.special.erf(v / math.sqrt(2.0)))


def _gelu_tanh_ref(v):      # same tanh approximation the kernel uses
    c0 = 0.7978845608028654
    c1 = 0.044715
    return 0.5 * v * (1.0 + jnp.tanh(c0 * (v + c1 * v * v * v)))


def informer_ref(x, p, *, gelu):
    def ln(h, g, b):
        mu = h.mean(-1, keepdims=True)
        var = ((h - mu) ** 2).mean(-1, keepdims=True)
        return (h - mu) / jnp.sqrt(var + LN_EPS) * g + b

    h = x @ p["w_in"] + p["b_in"]
    for l in range(E_LAYERS):
        v = h @ p["w_v"] + p["b_v"]                  # unfused reference path
        a = v @ p["w_o"] + p["b_o"]
        h = ln(h + a, p["ln1g"][l], p["ln1b"][l])
        y = gelu(h @ p["c1w"][l] + p["c1b"][l])
        y = y @ p["c2w"][l] + p["c2b"][l]
        h = ln(h + y, p["ln2g"][l], p["ln2b"][l])
    h = ln(h, p["lng"], p["lnb"])
    o = gelu(h @ p["w1"] + p["b1"])
    return o @ p["w2"] + p["b2"]


if __name__ == "__main__":
    key = jax.random.PRNGKey(0)
    kx, kp = jax.random.split(key)
    B = 8
    x = jax.random.normal(kx, (B, INPUT_DIM), dtype=jnp.float32)
    params = init_params(kp)

    # 1) Forced-f32 kernel vs pure-JAX reference using the SAME tanh-GELU math:
    #    tight check of the Pallas implementation (weight fusion only changes
    #    f32 rounding order).
    out_f32 = jax.block_until_ready(informer_forward(x, params, compute_dtype=jnp.float32))
    ref_tanh = informer_ref(x, params, gelu=_gelu_tanh_ref)
    assert out_f32.shape == (B, OUTPUT_DIM)
    assert bool(jnp.allclose(out_f32, ref_tanh, atol=1e-4, rtol=1e-4)), \
        "f32 kernel vs tanh-GELU reference mismatch"

    # 2) vs the exact erf-GELU reference (what torch's default F.gelu / nn.GELU()
    #    computes): the tanh approximation stays well below this tolerance.
    ref_erf = informer_ref(x, params, gelu=_gelu_erf_ref)
    assert bool(jnp.allclose(out_f32, ref_erf, atol=5e-3, rtol=5e-3)), \
        "kernel vs exact erf-GELU reference mismatch"

    # 3) Generation-default path (bf16 elementwise on v6e/v7x, f32 elsewhere):
    #    loose tolerance accounts for bf16 activation/weight rounding.
    out_auto = jax.block_until_ready(informer_forward(x, params))
    assert out_auto.shape == (B, OUTPUT_DIM)
    assert bool(jnp.allclose(out_auto, ref_tanh, atol=5e-2, rtol=5e-2)), \
        "auto-dtype kernel mismatch"

    print("KERNEL_OK")
</pallas_src>

<mosaic_0001>
module attributes {stable_mosaic.version = 11 : i64} {
  func.func @informer_kernel(%arg0: i32, %arg1: memref<8x16xf32, #tpu.memory_space<vmem>>, %arg2: memref<16x32xf32, #tpu.memory_space<vmem>>, %arg3: memref<32x32xf32, #tpu.memory_space<vmem>>, %arg4: memref<2x32x64xf32, #tpu.memory_space<vmem>>, %arg5: memref<2x64x32xf32, #tpu.memory_space<vmem>>, %arg6: memref<32x64xf32, #tpu.memory_space<vmem>>, %arg7: memref<64x128xf32, #tpu.memory_space<vmem>>, %arg8: memref<14x32xf32, #tpu.memory_space<vmem>>, %arg9: memref<3x64xf32, #tpu.memory_space<vmem>>, %arg10: memref<1x128xf32, #tpu.memory_space<vmem>>, %arg11: memref<8x128xf32, #tpu.memory_space<vmem>>) attributes {dimension_semantics = [#tpu.dimension_semantics<parallel>], iteration_bounds = array<i64: 1>, scalar_prefetch = 0 : i64, scratch_operands = 0 : i64, tpu.core_type = #tpu.core_type<tc>, window_params = [{transform_indices = @transform_0, window_bounds = array<i64: 8, 16>}, {pipeline_mode = #tpu.pipeline_mode<synchronous>, transform_indices = @transform_1, window_bounds = array<i64: 16, 32>}, {pipeline_mode = #tpu.pipeline_mode<synchronous>, transform_indices = @transform_2, window_bounds = array<i64: 32, 32>}, {pipeline_mode = #tpu.pipeline_mode<synchronous>, transform_indices = @transform_3, window_bounds = array<i64: 2, 32, 64>}, {pipeline_mode = #tpu.pipeline_mode<synchronous>, transform_indices = @transform_4, window_bounds = array<i64: 2, 64, 32>}, {pipeline_mode = #tpu.pipeline_mode<synchronous>, transform_indices = @transform_5, window_bounds = array<i64: 32, 64>}, {pipeline_mode = #tpu.pipeline_mode<synchronous>, transform_indices = @transform_6, window_bounds = array<i64: 64, 128>}, {pipeline_mode = #tpu.pipeline_mode<synchronous>, transform_indices = @transform_7, window_bounds = array<i64: 14, 32>}, {pipeline_mode = #tpu.pipeline_mode<synchronous>, transform_indices = @transform_8, window_bounds = array<i64: 3, 64>}, {pipeline_mode = #tpu.pipeline_mode<synchronous>, transform_indices = @transform_9, window_bounds = array<i64: 1, 128>}, {transform_indices = @transform_10, window_bounds = array<i64: 8, 128>}]} {
    %c0 = arith.constant 0 : index
    %c0_0 = arith.constant 0 : index
    %0 = vector.load %arg1[%c0, %c0_0] : memref<8x16xf32, #tpu.memory_space<vmem>>, vector<8x16xf32>
    %c0_1 = arith.constant 0 : index
    %c0_2 = arith.constant 0 : index
    %1 = vector.load %arg2[%c0_1, %c0_2] : memref<16x32xf32, #tpu.memory_space<vmem>>, vector<16x32xf32>
    %cst = arith.constant dense<0.000000e+00> : vector<8x32xf32>
    %2 = tpu.matmul %0, %1, %cst {dimension_numbers = #tpu.dot_dimension_numbers<[1], [0], [0], [1], [0, 0, 1, 1], [], []>} : vector<8x16xf32>, vector<16x32xf32>, vector<8x32xf32> -> vector<8x32xf32>
    %c0_3 = arith.constant 0 : index
    %c0_4 = arith.constant 0 : index
    %3 = vector.load %arg8[%c0_3, %c0_4] : memref<14x32xf32, #tpu.memory_space<vmem>>, vector<1x32xf32>
    %4 = vector.broadcast %3 : vector<1x32xf32> to vector<8x32xf32>
    %5 = arith.addf %2, %4 : vector<8x32xf32>
    %c3 = arith.constant 3 : index
    %c0_5 = arith.constant 0 : index
    %6 = vector.load %arg8[%c3, %c0_5] : memref<14x32xf32, #tpu.memory_space<vmem>>, vector<1x32xf32>
    %c4 = arith.constant 4 : index
    %c0_6 = arith.constant 0 : index
    %7 = vector.load %arg8[%c4, %c0_6] : memref<14x32xf32, #tpu.memory_space<vmem>>, vector<1x32xf32>
    %cst_7 = arith.constant dense<0.000000e+00> : vector<8xf32>
    %8 = vector.multi_reduction <add>, %5, %cst_7 [1] : vector<8x32xf32> to vector<8xf32>
    %9 = vector.shape_cast %8 : vector<8xf32> to vector<8x1xf32>
    %cst_8 = arith.constant 3.200000e+01 : f32
    %10 = vector.broadcast %cst_8 : f32 to vector<8x1xf32>
    %11 = arith.divf %9, %10 : vector<8x1xf32>
    %12 = vector.broadcast %11 : vector<8x1xf32> to vector<8x32xf32>
    %13 = arith.subf %5, %12 : vector<8x32xf32>
    %14 = arith.mulf %13, %13 : vector<8x32xf32>
    %cst_9 = arith.constant dense<0.000000e+00> : vector<8xf32>
    %15 = vector.multi_reduction <add>, %14, %cst_9 [1] : vector<8x32xf32> to vector<8xf32>
    %16 = vector.shape_cast %15 : vector<8xf32> to vector<8x1xf32>
    %cst_10 = arith.constant 3.200000e+01 : f32
    %17 = vector.broadcast %cst_10 : f32 to vector<8x1xf32>
    %18 = arith.divf %16, %17 : vector<8x1xf32>
    %cst_11 = arith.constant 9.99999974E-6 : f32
    %19 = vector.broadcast %cst_11 : f32 to vector<8x1xf32>
    %20 = arith.addf %18, %19 : vector<8x1xf32>
    %21 = math.rsqrt %20 : vector<8x1xf32>
    %22 = vector.broadcast %21 : vector<8x1xf32> to vector<8x32xf32>
    %23 = arith.mulf %13, %22 : vector<8x32xf32>
    %24 = vector.broadcast %6 : vector<1x32xf32> to vector<8x32xf32>
    %25 = arith.mulf %23, %24 : vector<8x32xf32>
    %26 = vector.broadcast %7 : vector<1x32xf32> to vector<8x32xf32>
    %27 = arith.addf %25, %26 : vector<8x32xf32>
    %c0_12 = arith.constant 0 : index
    %c0_13 = arith.constant 0 : index
    %c0_14 = arith.constant 0 : index
    %28 = vector.load %arg4[%c0_12, %c0_13, %c0_14] : memref<2x32x64xf32, #tpu.memory_space<vmem>>, vector<1x32x64xf32>
    %29 = vector.shape_cast %28 : vector<1x32x64xf32> to vector<32x64xf32>
    %cst_15 = arith.constant dense<0.000000e+00> : vector<8x64xf32>
    %30 = tpu.matmul %27, %29, %cst_15 {dimension_numbers = #tpu.dot_dimension_numbers<[1], [0], [0], [1], [0, 0, 1, 1], [], []>} : vector<8x32xf32>, vector<32x64xf32>, vector<8x64xf32> -> vector<8x64xf32>
    %c0_16 = arith.constant 0 : index
    %c0_17 = arith.constant 0 : index
    %31 = vector.load %arg9[%c0_16, %c0_17] : memref<3x64xf32, #tpu.memory_space<vmem>>, vector<1x64xf32>
    %32 = vector.broadcast %31 : vector<1x64xf32> to vector<8x64xf32>
    %33 = arith.addf %30, %32 : vector<8x64xf32>
    %34 = arith.mulf %33, %33 : vector<8x64xf32>
    %35 = arith.mulf %34, %33 : vector<8x64xf32>
    %cst_18 = arith.constant 4.471500e-02 : f32
    %36 = vector.broadcast %cst_18 : f32 to vector<8x64xf32>
    %37 = arith.mulf %36, %35 : vector<8x64xf32>
    %38 = arith.addf %33, %37 : vector<8x64xf32>
    %cst_19 = arith.constant 0.797884583 : f32
    %39 = vector.broadcast %cst_19 : f32 to vector<8x64xf32>
    %40 = arith.mulf %39, %38 : vector<8x64xf32>
    %41 = math.tanh %40 : vector<8x64xf32>
    %cst_20 = arith.constant 5.000000e-01 : f32
    %42 = vector.broadcast %cst_20 : f32 to vector<8x64xf32>
    %43 = arith.mulf %42, %33 : vector<8x64xf32>
    %cst_21 = arith.constant 1.000000e+00 : f32
    %44 = vector.broadcast %cst_21 : f32 to vector<8x64xf32>
    %45 = arith.addf %44, %41 : vector<8x64xf32>
    %46 = arith.mulf %43, %45 : vector<8x64xf32>
    %c0_22 = arith.constant 0 : index
    %c0_23 = arith.constant 0 : index
    %c0_24 = arith.constant 0 : index
    %47 = vector.load %arg5[%c0_22, %c0_23, %c0_24] : memref<2x64x32xf32, #tpu.memory_space<vmem>>, vector<1x64x32xf32>
    %48 = vector.shape_cast %47 : vector<1x64x32xf32> to vector<64x32xf32>
    %cst_25 = arith.constant dense<0.000000e+00> : vector<8x32xf32>
    %49 = tpu.matmul %46, %48, %cst_25 {dimension_numbers = #tpu.dot_dimension_numbers<[1], [0], [0], [1], [0, 0, 1, 1], [], []>} : vector<8x64xf32>, vector<64x32xf32>, vector<8x32xf32> -> vector<8x32xf32>
    %c2 = arith.constant 2 : index
    %c0_26 = arith.constant 0 : index
    %50 = vector.load %arg8[%c2, %c0_26] : memref<14x32xf32, #tpu.memory_space<vmem>>, vector<1x32xf32>
    %51 = vector.broadcast %50 : vector<1x32xf32> to vector<8x32xf32>
    %52 = arith.addf %49, %51 : vector<8x32xf32>
    %53 = arith.addf %27, %52 : vector<8x32xf32>
    %c5 = arith.constant 5 : index
    %c0_27 = arith.constant 0 : index
    %54 = vector.load %arg8[%c5, %c0_27] : memref<14x32xf32, #tpu.memory_space<vmem>>, vector<1x32xf32>
    %c6 = arith.constant 6 : index
    %c0_28 = arith.constant 0 : index
    %55 = vector.load %arg8[%c6, %c0_28] : memref<14x32xf32, #tpu.memory_space<vmem>>, vector<1x32xf32>
    %cst_29 = arith.constant dense<0.000000e+00> : vector<8xf32>
    %56 = vector.multi_reduction <add>, %53, %cst_29 [1] : vector<8x32xf32> to vector<8xf32>
    %57 = vector.shape_cast %56 : vector<8xf32> to vector<8x1xf32>
    %cst_30 = arith.constant 3.200000e+01 : f32
    %58 = vector.broadcast %cst_30 : f32 to vector<8x1xf32>
    %59 = arith.divf %57, %58 : vector<8x1xf32>
    %60 = vector.broadcast %59 : vector<8x1xf32> to vector<8x32xf32>
    %61 = arith.subf %53, %60 : vector<8x32xf32>
    %62 = arith.mulf %61, %61 : vector<8x32xf32>
    %cst_31 = arith.constant dense<0.000000e+00> : vector<8xf32>
    %63 = vector.multi_reduction <add>, %62, %cst_31 [1] : vector<8x32xf32> to vector<8xf32>
    %64 = vector.shape_cast %63 : vector<8xf32> to vector<8x1xf32>
    %cst_32 = arith.constant 3.200000e+01 : f32
    %65 = vector.broadcast %cst_32 : f32 to vector<8x1xf32>
    %66 = arith.divf %64, %65 : vector<8x1xf32>
    %cst_33 = arith.constant 9.99999974E-6 : f32
    %67 = vector.broadcast %cst_33 : f32 to vector<8x1xf32>
    %68 = arith.addf %66, %67 : vector<8x1xf32>
    %69 = math.rsqrt %68 : vector<8x1xf32>
    %70 = vector.broadcast %69 : vector<8x1xf32> to vector<8x32xf32>
    %71 = arith.mulf %61, %70 : vector<8x32xf32>
    %72 = vector.broadcast %54 : vector<1x32xf32> to vector<8x32xf32>
    %73 = arith.mulf %71, %72 : vector<8x32xf32>
    %74 = vector.broadcast %55 : vector<1x32xf32> to vector<8x32xf32>
    %75 = arith.addf %73, %74 : vector<8x32xf32>
    %c0_34 = arith.constant 0 : index
    %c0_35 = arith.constant 0 : index
    %76 = vector.load %arg3[%c0_34, %c0_35] : memref<32x32xf32, #tpu.memory_space<vmem>>, vector<32x32xf32>
    %cst_36 = arith.constant dense<0.000000e+00> : vector<8x32xf32>
    %77 = tpu.matmul %75, %76, %cst_36 {dimension_numbers = #tpu.dot_dimension_numbers<[1], [0], [0], [1], [0, 0, 1, 1], [], []>} : vector<8x32xf32>, vector<32x32xf32>, vector<8x32xf32> -> vector<8x32xf32>
    %c1 = arith.constant 1 : index
    %c0_37 = arith.constant 0 : index
    %78 = vector.load %arg8[%c1, %c0_37] : memref<14x32xf32, #tpu.memory_space<vmem>>, vector<1x32xf32>
    %79 = vector.broadcast %78 : vector<1x32xf32> to vector<8x32xf32>
    %80 = arith.addf %77, %79 : vector<8x32xf32>
    %c8 = arith.constant 8 : index
    %c0_38 = arith.constant 0 : index
    %81 = vector.load %arg8[%c8, %c0_38] : memref<14x32xf32, #tpu.memory_space<vmem>>, vector<1x32xf32>
    %c9 = arith.constant 9 : index
    %c0_39 = arith.constant 0 : index
    %82 = vector.load %arg8[%c9, %c0_39] : memref<14x32xf32, #tpu.memory_space<vmem>>, vector<1x32xf32>
    %cst_40 = arith.constant dense<0.000000e+00> : vector<8xf32>
    %83 = vector.multi_reduction <add>, %80, %cst_40 [1] : vector<8x32xf32> to vector<8xf32>
    %84 = vector.shape_cast %83 : vector<8xf32> to vector<8x1xf32>
    %cst_41 = arith.constant 3.200000e+01 : f32
    %85 = vector.broadcast %cst_41 : f32 to vector<8x1xf32>
    %86 = arith.divf %84, %85 : vector<8x1xf32>
    %87 = vector.broadcast %86 : vector<8x1xf32> to vector<8x32xf32>
    %88 = arith.subf %80, %87 : vector<8x32xf32>
    %89 = arith.mulf %88, %88 : vector<8x32xf32>
    %cst_42 = arith.constant dense<0.000000e+00> : vector<8xf32>
    %90 = vector.multi_reduction <add>, %89, %cst_42 [1] : vector<8x32xf32> to vector<8xf32>
    %91 = vector.shape_cast %90 : vector<8xf32> to vector<8x1xf32>
    %cst_43 = arith.constant 3.200000e+01 : f32
    %92 = vector.broadcast %cst_43 : f32 to vector<8x1xf32>
    %93 = arith.divf %91, %92 : vector<8x1xf32>
    %cst_44 = arith.constant 9.99999974E-6 : f32
    %94 = vector.broadcast %cst_44 : f32 to vector<8x1xf32>
    %95 = arith.addf %93, %94 : vector<8x1xf32>
    %96 = math.rsqrt %95 : vector<8x1xf32>
    %97 = vector.broadcast %96 : vector<8x1xf32> to vector<8x32xf32>
    %98 = arith.mulf %88, %97 : vector<8x32xf32>
    %99 = vector.broadcast %81 : vector<1x32xf32> to vector<8x32xf32>
    %100 = arith.mulf %98, %99 : vector<8x32xf32>
    %101 = vector.broadcast %82 : vector<1x32xf32> to vector<8x32xf32>
    %102 = arith.addf %100, %101 : vector<8x32xf32>
    %c1_45 = arith.constant 1 : index
    %c0_46 = arith.constant 0 : index
    %c0_47 = arith.constant 0 : index
    %103 = vector.load %arg4[%c1_45, %c0_46, %c0_47] : memref<2x32x64xf32, #tpu.memory_space<vmem>>, vector<1x32x64xf32>
    %104 = vector.shape_cast %103 : vector<1x32x64xf32> to vector<32x64xf32>
    %cst_48 = arith.constant dense<0.000000e+00> : vector<8x64xf32>
    %105 = tpu.matmul %102, %104, %cst_48 {dimension_numbers = #tpu.dot_dimension_numbers<[1], [0], [0], [1], [0, 0, 1, 1], [], []>} : vector<8x32xf32>, vector<32x64xf32>, vector<8x64xf32> -> vector<8x64xf32>
    %c1_49 = arith.constant 1 : index
    %c0_50 = arith.constant 0 : index
    %106 = vector.load %arg9[%c1_49, %c0_50] : memref<3x64xf32, #tpu.memory_space<vmem>>, vector<1x64xf32>
    %107 = vector.broadcast %106 : vector<1x64xf32> to vector<8x64xf32>
    %108 = arith.addf %105, %107 : vector<8x64xf32>
    %109 = arith.mulf %108, %108 : vector<8x64xf32>
    %110 = arith.mulf %109, %108 : vector<8x64xf32>
    %cst_51 = arith.constant 4.471500e-02 : f32
    %111 = vector.broadcast %cst_51 : f32 to vector<8x64xf32>
    %112 = arith.mulf %111, %110 : vector<8x64xf32>
    %113 = arith.addf %108, %112 : vector<8x64xf32>
    %cst_52 = arith.constant 0.797884583 : f32
    %114 = vector.broadcast %cst_52 : f32 to vector<8x64xf32>
    %115 = arith.mulf %114, %113 : vector<8x64xf32>
    %116 = math.tanh %115 : vector<8x64xf32>
    %cst_53 = arith.constant 5.000000e-01 : f32
    %117 = vector.broadcast %cst_53 : f32 to vector<8x64xf32>
    %118 = arith.mulf %117, %108 : vector<8x64xf32>
    %cst_54 = arith.constant 1.000000e+00 : f32
    %119 = vector.broadcast %cst_54 : f32 to vector<8x64xf32>
    %120 = arith.addf %119, %116 : vector<8x64xf32>
    %121 = arith.mulf %118, %120 : vector<8x64xf32>
    %c1_55 = arith.constant 1 : index
    %c0_56 = arith.constant 0 : index
    %c0_57 = arith.constant 0 : index
    %122 = vector.load %arg5[%c1_55, %c0_56, %c0_57] : memref<2x64x32xf32, #tpu.memory_space<vmem>>, vector<1x64x32xf32>
    %123 = vector.shape_cast %122 : vector<1x64x32xf32> to vector<64x32xf32>
    %cst_58 = arith.constant dense<0.000000e+00> : vector<8x32xf32>
    %124 = tpu.matmul %121, %123, %cst_58 {dimension_numbers = #tpu.dot_dimension_numbers<[1], [0], [0], [1], [0, 0, 1, 1], [], []>} : vector<8x64xf32>, vector<64x32xf32>, vector<8x32xf32> -> vector<8x32xf32>
    %c7 = arith.constant 7 : index
    %c0_59 = arith.constant 0 : index
    %125 = vector.load %arg8[%c7, %c0_59] : memref<14x32xf32, #tpu.memory_space<vmem>>, vector<1x32xf32>
    %126 = vector.broadcast %125 : vector<1x32xf32> to vector<8x32xf32>
    %127 = arith.addf %124, %126 : vector<8x32xf32>
    %128 = arith.addf %102, %127 : vector<8x32xf32>
    %c10 = arith.constant 10 : index
    %c0_60 = arith.constant 0 : index
    %129 = vector.load %arg8[%c10, %c0_60] : memref<14x32xf32, #tpu.memory_space<vmem>>, vector<1x32xf32>
    %c11 = arith.constant 11 : index
    %c0_61 = arith.constant 0 : index
    %130 = vector.load %arg8[%c11, %c0_61] : memref<14x32xf32, #tpu.memory_space<vmem>>, vector<1x32xf32>
    %cst_62 = arith.constant dense<0.000000e+00> : vector<8xf32>
    %131 = vector.multi_reduction <add>, %128, %cst_62 [1] : vector<8x32xf32> to vector<8xf32>
    %132 = vector.shape_cast %131 : vector<8xf32> to vector<8x1xf32>
    %cst_63 = arith.constant 3.200000e+01 : f32
    %133 = vector.broadcast %cst_63 : f32 to vector<8x1xf32>
    %134 = arith.divf %132, %133 : vector<8x1xf32>
    %135 = vector.broadcast %134 : vector<8x1xf32> to vector<8x32xf32>
    %136 = arith.subf %128, %135 : vector<8x32xf32>
    %137 = arith.mulf %136, %136 : vector<8x32xf32>
    %cst_64 = arith.constant dense<0.000000e+00> : vector<8xf32>
    %138 = vector.multi_reduction <add>, %137, %cst_64 [1] : vector<8x32xf32> to vector<8xf32>
    %139 = vector.shape_cast %138 : vector<8xf32> to vector<8x1xf32>
    %cst_65 = arith.constant 3.200000e+01 : f32
    %140 = vector.broadcast %cst_65 : f32 to vector<8x1xf32>
    %141 = arith.divf %139, %140 : vector<8x1xf32>
    %cst_66 = arith.constant 9.99999974E-6 : f32
    %142 = vector.broadcast %cst_66 : f32 to vector<8x1xf32>
    %143 = arith.addf %141, %142 : vector<8x1xf32>
    %144 = math.rsqrt %143 : vector<8x1xf32>
    %145 = vector.broadcast %144 : vector<8x1xf32> to vector<8x32xf32>
    %146 = arith.mulf %136, %145 : vector<8x32xf32>
    %147 = vector.broadcast %129 : vector<1x32xf32> to vector<8x32xf32>
    %148 = arith.mulf %146, %147 : vector<8x32xf32>
    %149 = vector.broadcast %130 : vector<1x32xf32> to vector<8x32xf32>
    %150 = arith.addf %148, %149 : vector<8x32xf32>
    %c12 = arith.constant 12 : index
    %c0_67 = arith.constant 0 : index
    %151 = vector.load %arg8[%c12, %c0_67] : memref<14x32xf32, #tpu.memory_space<vmem>>, vector<1x32xf32>
    %c13 = arith.constant 13 : index
    %c0_68 = arith.constant 0 : index
    %152 = vector.load %arg8[%c13, %c0_68] : memref<14x32xf32, #tpu.memory_space<vmem>>, vector<1x32xf32>
    %cst_69 = arith.constant dense<0.000000e+00> : vector<8xf32>
    %153 = vector.multi_reduction <add>, %150, %cst_69 [1] : vector<8x32xf32> to vector<8xf32>
    %154 = vector.shape_cast %153 : vector<8xf32> to vector<8x1xf32>
    %cst_70 = arith.constant 3.200000e+01 : f32
    %155 = vector.broadcast %cst_70 : f32 to vector<8x1xf32>
    %156 = arith.divf %154, %155 : vector<8x1xf32>
    %157 = vector.broadcast %156 : vector<8x1xf32> to vector<8x32xf32>
    %158 = arith.subf %150, %157 : vector<8x32xf32>
    %159 = arith.mulf %158, %158 : vector<8x32xf32>
    %cst_71 = arith.constant dense<0.000000e+00> : vector<8xf32>
    %160 = vector.multi_reduction <add>, %159, %cst_71 [1] : vector<8x32xf32> to vector<8xf32>
    %161 = vector.shape_cast %160 : vector<8xf32> to vector<8x1xf32>
    %cst_72 = arith.constant 3.200000e+01 : f32
    %162 = vector.broadcast %cst_72 : f32 to vector<8x1xf32>
    %163 = arith.divf %161, %162 : vector<8x1xf32>
    %cst_73 = arith.constant 9.99999974E-6 : f32
    %164 = vector.broadcast %cst_73 : f32 to vector<8x1xf32>
    %165 = arith.addf %163, %164 : vector<8x1xf32>
    %166 = math.rsqrt %165 : vector<8x1xf32>
    %167 = vector.broadcast %166 : vector<8x1xf32> to vector<8x32xf32>
    %168 = arith.mulf %158, %167 : vector<8x32xf32>
    %169 = vector.broadcast %151 : vector<1x32xf32> to vector<8x32xf32>
    %170 = arith.mulf %168, %169 : vector<8x32xf32>
    %171 = vector.broadcast %152 : vector<1x32xf32> to vector<8x32xf32>
    %172 = arith.addf %170, %171 : vector<8x32xf32>
    %c0_74 = arith.constant 0 : index
    %c0_75 = arith.constant 0 : index
    %173 = vector.load %arg6[%c0_74, %c0_75] : memref<32x64xf32, #tpu.memory_space<vmem>>, vector<32x64xf32>
    %cst_76 = arith.constant dense<0.000000e+00> : vector<8x64xf32>
    %174 = tpu.matmul %172, %173, %cst_76 {dimension_numbers = #tpu.dot_dimension_numbers<[1], [0], [0], [1], [0, 0, 1, 1], [], []>} : vector<8x32xf32>, vector<32x64xf32>, vector<8x64xf32> -> vector<8x64xf32>
    %c2_77 = arith.constant 2 : index
    %c0_78 = arith.constant 0 : index
    %175 = vector.load %arg9[%c2_77, %c0_78] : memref<3x64xf32, #tpu.memory_space<vmem>>, vector<1x64xf32>
    %176 = vector.broadcast %175 : vector<1x64xf32> to vector<8x64xf32>
    %177 = arith.addf %174, %176 : vector<8x64xf32>
    %178 = arith.mulf %177, %177 : vector<8x64xf32>
    %179 = arith.mulf %178, %177 : vector<8x64xf32>
    %cst_79 = arith.constant 4.471500e-02 : f32
    %180 = vector.broadcast %cst_79 : f32 to vector<8x64xf32>
    %181 = arith.mulf %180, %179 : vector<8x64xf32>
    %182 = arith.addf %177, %181 : vector<8x64xf32>
    %cst_80 = arith.constant 0.797884583 : f32
    %183 = vector.broadcast %cst_80 : f32 to vector<8x64xf32>
    %184 = arith.mulf %183, %182 : vector<8x64xf32>
    %185 = math.tanh %184 : vector<8x64xf32>
    %cst_81 = arith.constant 5.000000e-01 : f32
    %186 = vector.broadcast %cst_81 : f32 to vector<8x64xf32>
    %187 = arith.mulf %186, %177 : vector<8x64xf32>
    %cst_82 = arith.constant 1.000000e+00 : f32
    %188 = vector.broadcast %cst_82 : f32 to vector<8x64xf32>
    %189 = arith.addf %188, %185 : vector<8x64xf32>
    %190 = arith.mulf %187, %189 : vector<8x64xf32>
    %c0_83 = arith.constant 0 : index
    %c0_84 = arith.constant 0 : index
    %191 = vector.load %arg7[%c0_83, %c0_84] : memref<64x128xf32, #tpu.memory_space<vmem>>, vector<64x128xf32>
    %cst_85 = arith.constant dense<0.000000e+00> : vector<8x128xf32>
    %192 = tpu.matmul %190, %191, %cst_85 {dimension_numbers = #tpu.dot_dimension_numbers<[1], [0], [0], [1], [0, 0, 1, 1], [], []>} : vector<8x64xf32>, vector<64x128xf32>, vector<8x128xf32> -> vector<8x128xf32>
    %c0_86 = arith.constant 0 : index
    %c0_87 = arith.constant 0 : index
    %193 = vector.load %arg10[%c0_86, %c0_87] : memref<1x128xf32, #tpu.memory_space<vmem>>, vector<1x128xf32>
    %194 = vector.broadcast %193 : vector<1x128xf32> to vector<8x128xf32>
    %195 = arith.addf %192, %194 : vector<8x128xf32>
    %c0_88 = arith.constant 0 : index
    %c0_89 = arith.constant 0 : index
    %196 = vector.load %arg11[%c0_88, %c0_89] : memref<8x128xf32, #tpu.memory_space<vmem>>, vector<8x128xf32>
    tpu.vector_store %arg11[%c0_88, %c0_89], %195 {strides = array<i32>} : memref<8x128xf32, #tpu.memory_space<vmem>>, vector<8x128xf32>,
    return
  }
  func.func @transform_0(%arg0: i32) -> (i32, i32) {
    %c0_i32 = arith.constant 0 : i32
    %c0_i32_0 = arith.constant 0 : i32
    return %arg0, %c0_i32 : i32, i32
  }
  func.func @transform_1(%arg0: i32) -> (i32, i32) {
    %c0_i32 = arith.constant 0 : i32
    %c0_i32_0 = arith.constant 0 : i32
    %c0_i32_1 = arith.constant 0 : i32
    return %c0_i32, %c0_i32_0 : i32, i32
  }
  func.func @transform_2(%arg0: i32) -> (i32, i32) {
    %c0_i32 = arith.constant 0 : i32
    %c0_i32_0 = arith.constant 0 : i32
    %c0_i32_1 = arith.constant 0 : i32
    return %c0_i32, %c0_i32_0 : i32, i32
  }
  func.func @transform_3(%arg0: i32) -> (i32, i32, i32) {
    %c0_i32 = arith.constant 0 : i32
    %c0_i32_0 = arith.constant 0 : i32
    %c0_i32_1 = arith.constant 0 : i32
    %c0_i32_2 = arith.constant 0 : i32
    return %c0_i32, %c0_i32_0, %c0_i32_1 : i32, i32, i32
  }
  func.func @transform_4(%arg0: i32) -> (i32, i32, i32) {
    %c0_i32 = arith.constant 0 : i32
    %c0_i32_0 = arith.constant 0 : i32
    %c0_i32_1 = arith.constant 0 : i32
    %c0_i32_2 = arith.constant 0 : i32
    return %c0_i32, %c0_i32_0, %c0_i32_1 : i32, i32, i32
  }
  func.func @transform_5(%arg0: i32) -> (i32, i32) {
    %c0_i32 = arith.constant 0 : i32
    %c0_i32_0 = arith.constant 0 : i32
    %c0_i32_1 = arith.constant 0 : i32
    return %c0_i32, %c0_i32_0 : i32, i32
  }
  func.func @transform_6(%arg0: i32) -> (i32, i32) {
    %c0_i32 = arith.constant 0 : i32
    %c0_i32_0 = arith.constant 0 : i32
    %c0_i32_1 = arith.constant 0 : i32
    return %c0_i32, %c0_i32_0 : i32, i32
  }
  func.func @transform_7(%arg0: i32) -> (i32, i32) {
    %c0_i32 = arith.constant 0 : i32
    %c0_i32_0 = arith.constant 0 : i32
    %c0_i32_1 = arith.constant 0 : i32
    return %c0_i32, %c0_i32_0 : i32, i32
  }
  func.func @transform_8(%arg0: i32) -> (i32, i32) {
    %c0_i32 = arith.constant 0 : i32
    %c0_i32_0 = arith.constant 0 : i32
    %c0_i32_1 = arith.constant 0 : i32
    return %c0_i32, %c0_i32_0 : i32, i32
  }
  func.func @transform_9(%arg0: i32) -> (i32, i32) {
    %c0_i32 = arith.constant 0 : i32
    %c0_i32_0 = arith.constant 0 : i32
    %c0_i32_1 = arith.constant 0 : i32
    return %c0_i32, %c0_i32_0 : i32, i32
  }
  func.func @transform_10(%arg0: i32) -> (i32, i32) {
    %c0_i32 = arith.constant 0 : i32
    %c0_i32_0 = arith.constant 0 : i32
    return %arg0, %c0_i32 : i32, i32
  }
}

</mosaic_0001>

<llo_original>
// kernel: tpu_custom_call.1
$region0: #{tpu_custom_call.1}
  #allocation0 [shape = 'u32[]', space=smem, size = 0x4, offset = 0x4, fixed_abs, tag = 'smem constant byte address 0x4 - core index']
  #allocation1 [shape = 'u32[72,128]{1,0:T(1,128)}', space=vmem, size = 0x9000, scoped, tag = 'internal scratch']
  %s0 = inlined_call_operand.hbm [shape: f32[8,16], index: 0, kind: input, shape index: {}]
  %s1 = inlined_call_operand.hbm [shape: f32[16,32], index: 1, kind: input, shape index: {}]
  %s2 = inlined_call_operand.vmem [shape: f32[32,32], index: 2, kind: input, shape index: {}]
  %s3 = inlined_call_operand.vmem [shape: f32[2,32,64], index: 3, kind: input, shape index: {}]
  %s4 = inlined_call_operand.vmem [shape: f32[2,64,32], index: 4, kind: input, shape index: {}]
  %s5 = inlined_call_operand.vmem [shape: f32[32,64], index: 5, kind: input, shape index: {}]
  %s6 = inlined_call_operand.vmem [shape: f32[64,128], index: 6, kind: input, shape index: {}]
  %s7 = inlined_call_operand.hbm [shape: f32[14,32], index: 7, kind: input, shape index: {}]
  %s8 = inlined_call_operand.vmem [shape: f32[3,64], index: 8, kind: input, shape index: {}]
  %s9 = inlined_call_operand.vmem [shape: f32[1,128], index: 9, kind: input, shape index: {}]
  %s10 = inlined_call_operand.hbm [shape: f32[8,128], index: 10, kind: output, shape index: {}]
  %s11 = sld [smem:[#allocation0]]
  $region62: #{tpu_custom_call.1} parent=0
    _
  %s13 = ssub.s32 1, %s11
  %s14 = scalar_select 0, %s13, %s11
  $region1: #{tpu_custom_call.1} parent=0
    #allocation2 [shape = 'u8[4096]{0}', space=vmem, size = 0x1000, scoped, tag = 'input window, operand 0, single buffered']
    #allocation3 [shape = 's32[1]{0}', space=sflag, size = 0x4, scoped, tag = 'scoped memory for tpu_custom_call.1']
    #allocation4 [shape = 's32[1]{0}', space=sflag, size = 0x4, scoped, tag = 'scoped memory for tpu_custom_call.1']
    #allocation5 [shape = 'u8[8192]{0}', space=vmem, size = 0x2000, scoped, tag = 'input window, operand 1, single buffered']
    #allocation6 [shape = 's32[1]{0}', space=sflag, size = 0x4, scoped, tag = 'scoped memory for tpu_custom_call.1']
    #allocation7 [shape = 'u8[8192]{0}', space=vmem, size = 0x2000, scoped, tag = 'input window, operand 7, single buffered']
    #allocation8 [shape = 'u8[4096]{0}', space=vmem, size = 0x1000, scoped, tag = 'output window, operand 0, single buffered']
    %15 = vsyncpa [#allocation3], 0
    %16 = vsyncpa [#allocation6], 0
    %17 = vsyncpa [#allocation4], 0
    // Predicated region
    $region2: #{tpu_custom_call.1} parent=1 // pred_check
      _
    $region3: #{tpu_custom_call.1} parent=1 // pred_check_branch
      %19 = sbr.rel (0) target = $region5
    $region4: #{tpu_custom_call.1} parent=1 // pred_region
      %21 = vsyncadd [#allocation3], 0
      %s23 = sshll.u32 %s0, 4
      %s24 = int_to_ptr.hbm [resolvable:$true] %s23
      %s25 = sshll.u32 [#allocation2], 4
      %s26 = int_to_ptr.vmem [resolvable:$true] %s25
      %28 = dma.hbm_to_vmem [thread:$0]  %s24, 128, %s26, [#allocation3]
    $region5: #{tpu_custom_call.1} parent=1 // pred_fallthru
      _
    // Predicated region
    $region6: #{tpu_custom_call.1} parent=1 // pred_check
      _
    $region7: #{tpu_custom_call.1} parent=1 // pred_check_branch
      %30 = sbr.rel (0) target = $region9
    $region8: #{tpu_custom_call.1} parent=1 // pred_region
      %32 = vsyncadd [#allocation6], 0
      %s33 = sshll.u32 %s1, 4
      %s34 = int_to_ptr.hbm [resolvable:$true] %s33
      %s35 = sshll.u32 [#allocation5], 4
      %s36 = int_to_ptr.vmem [resolvable:$true] %s35
      %41 = dma.hbm_to_vmem [thread:$0]  %s34, 256, %s36, [#allocation6], 128, 128, 8
    $region9: #{tpu_custom_call.1} parent=1 // pred_fallthru
      _
    // Predicated region
    $region10: #{tpu_custom_call.1} parent=1 // pred_check
      _
    $region11: #{tpu_custom_call.1} parent=1 // pred_check_branch
      %43 = sbr.rel (0) target = $region13
    $region12: #{tpu_custom_call.1} parent=1 // pred_region
      _
    $region13: #{tpu_custom_call.1} parent=1 // pred_fallthru
      _
    // Predicated region
    $region14: #{tpu_custom_call.1} parent=1 // pred_check
      _
    $region15: #{tpu_custom_call.1} parent=1 // pred_check_branch
      %45 = sbr.rel (0) target = $region17
    $region16: #{tpu_custom_call.1} parent=1 // pred_region
      _
    $region17: #{tpu_custom_call.1} parent=1 // pred_fallthru
      _
    // Predicated region
    $region18: #{tpu_custom_call.1} parent=1 // pred_check
      _
    $region19: #{tpu_custom_call.1} parent=1 // pred_check_branch
      %47 = sbr.rel (0) target = $region21
    $region20: #{tpu_custom_call.1} parent=1 // pred_region
      _
    $region21: #{tpu_custom_call.1} parent=1 // pred_fallthru
      _
    // Predicated region
    $region22: #{tpu_custom_call.1} parent=1 // pred_check
      _
    $region23: #{tpu_custom_call.1} parent=1 // pred_check_branch
      %49 = sbr.rel (0) target = $region25
    $region24: #{tpu_custom_call.1} parent=1 // pred_region
      _
    $region25: #{tpu_custom_call.1} parent=1 // pred_fallthru
      _
    // Predicated region
    $region26: #{tpu_custom_call.1} parent=1 // pred_check
      _
    $region27: #{tpu_custom_call.1} parent=1 // pred_check_branch
      %51 = sbr.rel (0) target = $region29
    $region28: #{tpu_custom_call.1} parent=1 // pred_region
      _
    $region29: #{tpu_custom_call.1} parent=1 // pred_fallthru
      _
    // Predicated region
    $region30: #{tpu_custom_call.1} parent=1 // pred_check
      _
    $region31: #{tpu_custom_call.1} parent=1 // pred_check_branch
      %53 = sbr.rel (0) target = $region33
    $region32: #{tpu_custom_call.1} parent=1 // pred_region
      %55 = vsyncadd [#allocation6], 0
      %s56 = sshll.u32 %s7, 4
      %s57 = int_to_ptr.hbm [resolvable:$true] %s56
      %s58 = sshll.u32 [#allocation7], 4
      %s59 = int_to_ptr.vmem [resolvable:$true] %s58
      %64 = dma.hbm_to_vmem [thread:$0]  %s57, 256, %s59, [#allocation6], 128, 128, 8
    $region33: #{tpu_custom_call.1} parent=1 // pred_fallthru
      _
    // Predicated region
    $region34: #{tpu_custom_call.1} parent=1 // pred_check
      _
    $region35: #{tpu_custom_call.1} parent=1 // pred_check_branch
      %66 = sbr.rel (0) target = $region37
    $region36: #{tpu_custom_call.1} parent=1 // pred_region
      _
    $region37: #{tpu_custom_call.1} parent=1 // pred_fallthru
      _
    // Predicated region
    $region38: #{tpu_custom_call.1} parent=1 // pred_check
      _
    $region39: #{tpu_custom_call.1} parent=1 // pred_check_branch
      %68 = sbr.rel (0) target = $region41
    $region40: #{tpu_custom_call.1} parent=1 // pred_region
      _
    $region41: #{tpu_custom_call.1} parent=1 // pred_fallthru
      _
    // Predicated region
    $region42: #{tpu_custom_call.1} parent=1 // pred_check
      _
    $region43: #{tpu_custom_call.1} parent=1 // pred_check_branch
      %70 = sbr.rel (0) target = $region45
    $region44: #{tpu_custom_call.1} parent=1 // pred_region
      %72 = dma.done [#allocation3], 128
    $region45: #{tpu_custom_call.1} parent=1 // pred_fallthru
      _
    // Predicated region
    $region46: #{tpu_custom_call.1} parent=1 // pred_check
      _
    $region47: #{tpu_custom_call.1} parent=1 // pred_check_branch
      %74 = sbr.rel (0) target = $region49
    $region48: #{tpu_custom_call.1} parent=1 // pred_region
      %76 = dma.done [#allocation6], 256
    $region49: #{tpu_custom_call.1} parent=1 // pred_fallthru
      _
    // Predicated region
    $region50: #{tpu_custom_call.1} parent=1 // pred_check
      _
    $region51: #{tpu_custom_call.1} parent=1 // pred_check_branch
      %78 = sbr.rel (0) target = $region53
    $region52: #{tpu_custom_call.1} parent=1 // pred_region
      %80 = dma.done [#allocation6], 256
    $region53: #{tpu_custom_call.1} parent=1 // pred_fallthru
      _
    %v81 = vld [vmem:[#allocation2] sm:$0xff]
    %v82 = vld [vmem:[#allocation5] sm:$0xff]
    %v83 = vld [vmem:[#allocation5 + $0x8] sm:$0xff]
    %v84 = vld [vmem:[#allocation7] sm:$0x1]
    %v85 = vperm.slane %v84, 0
    %vm86 = vcmask 130048
    %v88 = vsel %vm86, %v81, 0
    %90 = vmatpush.msra.mxu0 0.0
    %91 = vmatpush.msra.mxu0 0.0
    %92 = vmatpush.msra.mxu0 0.0
    %93 = vmatpush.msra.mxu0 0.0
    %94 = vmatpush.msra.mxu0 0.0
    %95 = vmatpush.msra.mxu0 0.0
    %96 = vmatpush.msra.mxu0 0.0
    %97 = vmatpush.msra.mxu0 0.0
    %98 = vmatpush.msra.mxu0 0.0
    %99 = vmatpush.msra.mxu0 0.0
    %100 = vmatpush.msra.mxu0 0.0
    %101 = vmatpush.msra.mxu0 0.0
    %102 = vmatpush.msra.mxu0 0.0
    %103 = vmatpush.msra.mxu0 0.0
    %104 = vmatpush.msra.mxu0 %v83
    %105 = vmatpush.msra.mxu0 %v82
    %106 = vmatmul.f32.gmra.mxu0 %v88
    %v107 = vpop.f32.mrf.mxu0
    %v108 = vadd.f32 %v85, %v107
    %109 = vdwg.mxu0
    %v110 = vld [vmem:[#allocation7 + $0x3] sm:$0x1]
    %v111 = vld [vmem:[#allocation7 + $0x4] sm:$0x1]
    %vm112 = vcmask 261120
    %v113 = vsel %vm112, %v108, 0.0
    %114 = vadd.xlane.f32.xlu0 %v113
    %v115 = vpop.xlane.xlu0 %114
    %v116 = vrcp.pop 32.0
    %v117 = vmul.f32 32.0, %v116
    %v118 = vsub.f32 1.0, %v117
    %v119 = vmul.f32 %v116, %v118
    %v120 = vadd.f32 %v116, %v119
    %vm121 = vweird.f32 %v116
    %v122 = vsel %vm121, %v116, %v120
    %v123 = vmul.f32 %v115, %v122
    %v124 = vsub.f32 %v108, %v123
    %v125 = vmul.f32 %v124, %v124
    %v126 = vsel %vm112, %v125, 0.0
    %127 = vadd.xlane.f32.xlu0 %v126
    %v128 = vpop.xlane.xlu0 %127
    %v129 = vmul.f32 %v128, %v122
    %v130 = vadd.f32 %v129, 1e-05
    %v131 = vrsqrt.pop %v130
    %v132 = vmul.f32 %v131, %v130
    %v133 = vmul.f32 %v132, %v131
    %v134 = vmul.f32 0.5, %v133
    %v135 = vsub.f32 1.5, %v134
    %v136 = vmul.f32 %v131, %v135
    %vm137 = vweird.f32 %v130
    %vm138 = vweird.f32 %v131
    %vm139 = vmor %vm137, %vm138
    %v140 = vsel %vm139, %v131, %v136
    %v141 = vmul.f32 %v124, %v140
    %v142 = vperm.slane %v110, 0
    %v143 = vmul.f32 %v141, %v142
    %v144 = vperm.slane %v111, 0
    %v145 = vadd.f32 %v143, %v144
    %v146 = vld [vmem:[%s3] sm:$0xff]
    %v147 = vld [vmem:[%s3 + $0x8] sm:$0xff]
    %v148 = vld [vmem:[%s3 + $0x10] sm:$0xff]
    %v149 = vld [vmem:[%s3 + $0x18] sm:$0xff]
    %v150 = vld [vmem:[%s8] sm:$0x1]
    %v151 = vperm.slane %v150, 0
    %v153 = vsel %vm112, %v145, 0
    %155 = vmatpush.msra.mxu0 0.0
    %156 = vmatpush.msra.mxu0 0.0
    %157 = vmatpush.msra.mxu0 0.0
    %158 = vmatpush.msra.mxu0 0.0
    %159 = vmatpush.msra.mxu0 0.0
    %160 = vmatpush.msra.mxu0 0.0
    %161 = vmatpush.msra.mxu0 0.0
    %162 = vmatpush.msra.mxu0 0.0
    %163 = vmatpush.msra.mxu0 0.0
    %164 = vmatpush.msra.mxu0 0.0
    %165 = vmatpush.msra.mxu0 0.0
    %166 = vmatpush.msra.mxu0 0.0
    %167 = vmatpush.msra.mxu0 %v149
    %168 = vmatpush.msra.mxu0 %v148
    %169 = vmatpush.msra.mxu0 %v147
    %170 = vmatpush.msra.mxu0 %v146
    %171 = vmatmul.f32.gmra.mxu0 %v153
    %v172 = vpop.f32.mrf.mxu0
    %v173 = vadd.f32 %v151, %v172
    %174 = vdwg.mxu0
    %v175 = vmul.f32 %v173, %v173
    %v176 = vmul.f32 %v175, %v173
    %v177 = vmul.f32 %v176, 0.044715
    %v178 = vadd.f32 %v173, %v177
    %v179 = vmul.f32 %v178, 0.7978846
    %v180 = vtanh.pop %v179
    %v181 = vmul.f32 %v173, 0.5
    %v182 = vadd.f32 %v180, 1.0
    %v183 = vmul.f32 %v181, %v182
    %v184 = vld [vmem:[%s4] sm:$0xff]
    %v185 = vld [vmem:[%s4 + $0x8] sm:$0xff]
    %v186 = vld [vmem:[%s4 + $0x10] sm:$0xff]
    %v187 = vld [vmem:[%s4 + $0x18] sm:$0xff]
    %v188 = vld [vmem:[%s4 + $0x20] sm:$0xff]
    %v189 = vld [vmem:[%s4 + $0x28] sm:$0xff]
    %v190 = vld [vmem:[%s4 + $0x30] sm:$0xff]
    %v191 = vld [vmem:[%s4 + $0x38] sm:$0xff]
    %v192 = vld [vmem:[#allocation7 + $0x2] sm:$0x1]
    %v193 = vperm.slane %v192, 0
    %vm194 = vcmask 523264
    %v196 = vsel %vm194, %v183, 0
    %198 = vmatpush.msra.mxu0 0.0
    %199 = vmatpush.msra.mxu0 0.0
    %200 = vmatpush.msra.mxu0 0.0
    %201 = vmatpush.msra.mxu0 0.0
    %202 = vmatpush.msra.mxu0 0.0
    %203 = vmatpush.msra.mxu0 0.0
    %204 = vmatpush.msra.mxu0 0.0
    %205 = vmatpush.msra.mxu0 0.0
    %206 = vmatpush.msra.mxu0 %v191
    %207 = vmatpush.msra.mxu0 %v190
    %208 = vmatpush.msra.mxu0 %v189
    %209 = vmatpush.msra.mxu0 %v188
    %210 = vmatpush.msra.mxu0 %v187
    %211 = vmatpush.msra.mxu0 %v186
    %212 = vmatpush.msra.mxu0 %v185
    %213 = vmatpush.msra.mxu0 %v184
    %214 = vmatmul.f32.gmra.mxu0 %v196
    %v215 = vpop.f32.mrf.mxu0
    %v216 = vadd.f32 %v193, %v215
    %217 = vdwg.mxu0
    %v218 = vadd.f32 %v145, %v216
    %v219 = vld [vmem:[#allocation7 + $0x5] sm:$0x1]
    %v220 = vld [vmem:[#allocation7 + $0x6] sm:$0x1]
    %v221 = vsel %vm112, %v218, 0.0
    %222 = vadd.xlane.f32.xlu0 %v221
    %v223 = vpop.xlane.xlu0 %222
    %v224 = vmul.f32 %v223, %v122
    %v225 = vsub.f32 %v218, %v224
    %v226 = vmul.f32 %v225, %v225
    %v227 = vsel %vm112, %v226, 0.0
    %228 = vadd.xlane.f32.xlu0 %v227
    %v229 = vpop.xlane.xlu0 %228
    %v230 = vmul.f32 %v229, %v122
    %v231 = vadd.f32 %v230, 1e-05
    %v232 = vrsqrt.pop %v231
    %v233 = vmul.f32 %v232, %v231
    %v234 = vmul.f32 %v233, %v232
    %v235 = vmul.f32 0.5, %v234
    %v236 = vsub.f32 1.5, %v235
    %v237 = vmul.f32 %v232, %v236
    %vm238 = vweird.f32 %v231
    %vm239 = vweird.f32 %v232
    %vm240 = vmor %vm238, %vm239
    %v241 = vsel %vm240, %v232, %v237
    %v242 = vmul.f32 %v225, %v241
    %v243 = vperm.slane %v219, 0
    %v244 = vmul.f32 %v242, %v243
    %v245 = vperm.slane %v220, 0
    %v246 = vadd.f32 %v244, %v245
    %v247 = vld [vmem:[%s2] sm:$0xff]
    %v248 = vld [vmem:[%s2 + $0x8] sm:$0xff]
    %v249 = vld [vmem:[%s2 + $0x10] sm:$0xff]
    %v250 = vld [vmem:[%s2 + $0x18] sm:$0xff]
    %v251 = vld [vmem:[#allocation7 + $0x1] sm:$0x1]
    %v252 = vperm.slane %v251, 0
    %v254 = vsel %vm112, %v246, 0
    %256 = vmatpush.msra.mxu0 0.0
    %257 = vmatpush.msra.mxu0 0.0
    %258 = vmatpush.msra.mxu0 0.0
    %259 = vmatpush.msra.mxu0 0.0
    %260 = vmatpush.msra.mxu0 0.0
    %261 = vmatpush.msra.mxu0 0.0
    %262 = vmatpush.msra.mxu0 0.0
    %263 = vmatpush.msra.mxu0 0.0
    %264 = vmatpush.msra.mxu0 0.0
    %265 = vmatpush.msra.mxu0 0.0
    %266 = vmatpush.msra.mxu0 0.0
    %267 = vmatpush.msra.mxu0 0.0
    %268 = vmatpush.msra.mxu0 %v250
    %269 = vmatpush.msra.mxu0 %v249
    %270 = vmatpush.msra.mxu0 %v248
    %271 = vmatpush.msra.mxu0 %v247
    %272 = vmatmul.f32.gmra.mxu0 %v254
    %v273 = vpop.f32.mrf.mxu0
    %v274 = vadd.f32 %v252, %v273
    %275 = vdwg.mxu0
    %v276 = vld [vmem:[#allocation7 + $0x8] sm:$0x1]
    %v277 = vld [vmem:[#allocation7 + $0x9] sm:$0x1]
    %v278 = vsel %vm112, %v274, 0.0
    %279 = vadd.xlane.f32.xlu0 %v278
    %v280 = vpop.xlane.xlu0 %279
    %v281 = vmul.f32 %v280, %v122
    %v282 = vsub.f32 %v274, %v281
    %v283 = vmul.f32 %v282, %v282
    %v284 = vsel %vm112, %v283, 0.0
    %285 = vadd.xlane.f32.xlu0 %v284
    %v286 = vpop.xlane.xlu0 %285
    %v287 = vmul.f32 %v286, %v122
    %v288 = vadd.f32 %v287, 1e-05
    %v289 = vrsqrt.pop %v288
    %v290 = vmul.f32 %v289, %v288
    %v291 = vmul.f32 %v290, %v289
    %v292 = vmul.f32 0.5, %v291
    %v293 = vsub.f32 1.5, %v292
    %v294 = vmul.f32 %v289, %v293
    %vm295 = vweird.f32 %v288
    %vm296 = vweird.f32 %v289
    %vm297 = vmor %vm295, %vm296
    %v298 = vsel %vm297, %v289, %v294
    %v299 = vmul.f32 %v282, %v298
    %v300 = vperm.slane %v276, 0
    %v301 = vmul.f32 %v299, %v300
    %v302 = vperm.slane %v277, 0
    %v303 = vadd.f32 %v301, %v302
    %s304 = scalar_lea.vmem %s3, 32
    %v305 = vld [vmem:[%s304] sm:$0xff]
    %v306 = vld [vmem:[%s304 + $0x8] sm:$0xff]
    %v307 = vld [vmem:[%s304 + $0x10] sm:$0xff]
    %v308 = vld [vmem:[%s304 + $0x18] sm:$0xff]
    %v309 = vld [vmem:[%s8 + $0x1] sm:$0x1]
    %v310 = vperm.slane %v309, 0
    %v312 = vsel %vm112, %v303, 0
    %314 = vmatpush.msra.mxu0 0.0
    %315 = vmatpush.msra.mxu0 0.0
    %316 = vmatpush.msra.mxu0 0.0
    %317 = vmatpush.msra.mxu0 0.0
    %318 = vmatpush.msra.mxu0 0.0
    %319 = vmatpush.msra.mxu0 0.0
    %320 = vmatpush.msra.mxu0 0.0
    %321 = vmatpush.msra.mxu0 0.0
    %322 = vmatpush.msra.mxu0 0.0
    %323 = vmatpush.msra.mxu0 0.0
    %324 = vmatpush.msra.mxu0 0.0
    %325 = vmatpush.msra.mxu0 0.0
    %326 = vmatpush.msra.mxu0 %v308
    %327 = vmatpush.msra.mxu0 %v307
    %328 = vmatpush.msra.mxu0 %v306
    %329 = vmatpush.msra.mxu0 %v305
    %330 = vmatmul.f32.gmra.mxu0 %v312
    %v331 = vpop.f32.mrf.mxu0
    %v332 = vadd.f32 %v310, %v331
    %333 = vdwg.mxu0
    %v334 = vmul.f32 %v332, %v332
    %v335 = vmul.f32 %v334, %v332
    %v336 = vmul.f32 %v335, 0.044715
    %v337 = vadd.f32 %v332, %v336
    %v338 = vmul.f32 %v337, 0.7978846
    %v339 = vtanh.pop %v338
    %v340 = vmul.f32 %v332, 0.5
    %v341 = vadd.f32 %v339, 1.0
    %v342 = vmul.f32 %v340, %v341
    %s343 = scalar_lea.vmem %s4, 64
    %v344 = vld [vmem:[%s343] sm:$0xff]
    %v345 = vld [vmem:[%s343 + $0x8] sm:$0xff]
    %v346 = vld [vmem:[%s343 + $0x10] sm:$0xff]
    %v347 = vld [vmem:[%s343 + $0x18] sm:$0xff]
    %v348 = vld [vmem:[%s343 + $0x20] sm:$0xff]
    %v349 = vld [vmem:[%s343 + $0x28] sm:$0xff]
    %v350 = vld [vmem:[%s343 + $0x30] sm:$0xff]
    %v351 = vld [vmem:[%s343 + $0x38] sm:$0xff]
    %v352 = vld [vmem:[#allocation7 + $0x7] sm:$0x1]
    %v353 = vperm.slane %v352, 0
    %v355 = vsel %vm194, %v342, 0
    %357 = vmatpush.msra.mxu0 0.0
    %358 = vmatpush.msra.mxu0 0.0
    %359 = vmatpush.msra.mxu0 0.0
    %360 = vmatpush.msra.mxu0 0.0
    %361 = vmatpush.msra.mxu0 0.0
    %362 = vmatpush.msra.mxu0 0.0
    %363 = vmatpush.msra.mxu0 0.0
    %364 = vmatpush.msra.mxu0 0.0
    %365 = vmatpush.msra.mxu0 %v351
    %366 = vmatpush.msra.mxu0 %v350
    %367 = vmatpush.msra.mxu0 %v349
    %368 = vmatpush.msra.mxu0 %v348
    %369 = vmatpush.msra.mxu0 %v347
    %370 = vmatpush.msra.mxu0 %v346
    %371 = vmatpush.msra.mxu0 %v345
    %372 = vmatpush.msra.mxu0 %v344
    %373 = vmatmul.f32.gmra.mxu0 %v355
    %v374 = vpop.f32.mrf.mxu0
    %v375 = vadd.f32 %v353, %v374
    %376 = vdwg.mxu0
    %v377 = vadd.f32 %v303, %v375
    %v378 = vld [vmem:[#allocation7 + $0xa] sm:$0x1]
    %v379 = vld [vmem:[#allocation7 + $0xb] sm:$0x1]
    %v380 = vsel %vm112, %v377, 0.0
    %381 = vadd.xlane.f32.xlu0 %v380
    %v382 = vpop.xlane.xlu0 %381
    %v383 = vmul.f32 %v382, %v122
    %v384 = vsub.f32 %v377, %v383
    %v385 = vmul.f32 %v384, %v384
    %v386 = vsel %vm112, %v385, 0.0
    %387 = vadd.xlane.f32.xlu0 %v386
    %v388 = vpop.xlane.xlu0 %387
    %v389 = vmul.f32 %v388, %v122
    %v390 = vadd.f32 %v389, 1e-05
    %v391 = vrsqrt.pop %v390
    %v392 = vmul.f32 %v391, %v390
    %v393 = vmul.f32 %v392, %v391
    %v394 = vmul.f32 0.5, %v393
    %v395 = vsub.f32 1.5, %v394
    %v396 = vmul.f32 %v391, %v395
    %vm397 = vweird.f32 %v390
    %vm398 = vweird.f32 %v391
    %vm399 = vmor %vm397, %vm398
    %v400 = vsel %vm399, %v391, %v396
    %v401 = vmul.f32 %v384, %v400
    %v402 = vperm.slane %v378, 0
    %v403 = vmul.f32 %v401, %v402
    %v404 = vperm.slane %v379, 0
    %v405 = vadd.f32 %v403, %v404
    %v406 = vld [vmem:[#allocation7 + $0xc] sm:$0x1]
    %v407 = vld [vmem:[#allocation7 + $0xd] sm:$0x1]
    %v408 = vsel %vm112, %v405, 0.0
    %409 = vadd.xlane.f32.xlu0 %v408
    %v410 = vpop.xlane.xlu0 %409
    %v411 = vmul.f32 %v410, %v122
    %v412 = vsub.f32 %v405, %v411
    %v413 = vmul.f32 %v412, %v412
    %v414 = vsel %vm112, %v413, 0.0
    %415 = vadd.xlane.f32.xlu0 %v414
    %v416 = vpop.xlane.xlu0 %415
    %v417 = vmul.f32 %v416, %v122
    %v418 = vadd.f32 %v417, 1e-05
    %v419 = vrsqrt.pop %v418
    %v420 = vmul.f32 %v419, %v418
    %v421 = vmul.f32 %v420, %v419
    %v422 = vmul.f32 0.5, %v421
    %v423 = vsub.f32 1.5, %v422
    %v424 = vmul.f32 %v419, %v423
    %vm425 = vweird.f32 %v418
    %vm426 = vweird.f32 %v419
    %vm427 = vmor %vm425, %vm426
    %v428 = vsel %vm427, %v419, %v424
    %v429 = vmul.f32 %v412, %v428
    %v430 = vperm.slane %v406, 0
    %v431 = vmul.f32 %v429, %v430
    %v432 = vperm.slane %v407, 0
    %v433 = vadd.f32 %v431, %v432
    %v434 = vld [vmem:[%s5] sm:$0xff]
    %v435 = vld [vmem:[%s5 + $0x8] sm:$0xff]
    %v436 = vld [vmem:[%s5 + $0x10] sm:$0xff]
    %v437 = vld [vmem:[%s5 + $0x18] sm:$0xff]
    %v438 = vld [vmem:[%s8 + $0x2] sm:$0x1]
    %v439 = vperm.slane %v438, 0
    %v441 = vsel %vm112, %v433, 0
    %443 = vmatpush.msra.mxu0 0.0
    %444 = vmatpush.msra.mxu0 0.0
    %445 = vmatpush.msra.mxu0 0.0
    %446 = vmatpush.msra.mxu0 0.0
    %447 = vmatpush.msra.mxu0 0.0
    %448 = vmatpush.msra.mxu0 0.0
    %449 = vmatpush.msra.mxu0 0.0
    %450 = vmatpush.msra.mxu0 0.0
    %451 = vmatpush.msra.mxu0 0.0
    %452 = vmatpush.msra.mxu0 0.0
    %453 = vmatpush.msra.mxu0 0.0
    %454 = vmatpush.msra.mxu0 0.0
    %455 = vmatpush.msra.mxu0 %v437
    %456 = vmatpush.msra.mxu0 %v436
    %457 = vmatpush.msra.mxu0 %v435
    %458 = vmatpush.msra.mxu0 %v434
    %459 = vmatmul.f32.gmra.mxu0 %v441
    %v460 = vpop.f32.mrf.mxu0
    %v461 = vadd.f32 %v439, %v460
    %462 = vdwg.mxu0
    %v463 = vmul.f32 %v461, %v461
    %v464 = vmul.f32 %v463, %v461
    %v465 = vmul.f32 %v464, 0.044715
    %v466 = vadd.f32 %v461, %v465
    %v467 = vmul.f32 %v466, 0.7978846
    %v468 = vtanh.pop %v467
    %v469 = vmul.f32 %v461, 0.5
    %v470 = vadd.f32 %v468, 1.0
    %v471 = vmul.f32 %v469, %v470
    %v472 = vld [vmem:[%s6] sm:$0xff]
    %v473 = vld [vmem:[%s6 + $0x8] sm:$0xff]
    %v474 = vld [vmem:[%s6 + $0x10] sm:$0xff]
    %v475 = vld [vmem:[%s6 + $0x18] sm:$0xff]
    %v476 = vld [vmem:[%s6 + $0x20] sm:$0xff]
    %v477 = vld [vmem:[%s6 + $0x28] sm:$0xff]
    %v478 = vld [vmem:[%s6 + $0x30] sm:$0xff]
    %v479 = vld [vmem:[%s6 + $0x38] sm:$0xff]
    %v480 = vld [vmem:[%s9] sm:$0x1]
    %v482 = vperm.slane %v480, 0
    %v485 = vsel %vm194, %v471, 0
    %487 = vmatpush.msra.mxu0 0.0
    %488 = vmatpush.msra.mxu0 0.0
    %489 = vmatpush.msra.mxu0 0.0
    %490 = vmatpush.msra.mxu0 0.0
    %491 = vmatpush.msra.mxu0 0.0
    %492 = vmatpush.msra.mxu0 0.0
    %493 = vmatpush.msra.mxu0 0.0
    %494 = vmatpush.msra.mxu0 0.0
    %495 = vmatpush.msra.mxu0 %v479
    %496 = vmatpush.msra.mxu0 %v478
    %497 = vmatpush.msra.mxu0 %v477
    %498 = vmatpush.msra.mxu0 %v476
    %499 = vmatpush.msra.mxu0 %v475
    %500 = vmatpush.msra.mxu0 %v474
    %501 = vmatpush.msra.mxu0 %v473
    %502 = vmatpush.msra.mxu0 %v472
    %503 = vmatmul.f32.gmra.mxu0 %v485
    %v504 = vpop.f32.mrf.mxu0
    %v505 = vadd.f32 %v482, %v504
    %506 = vdwg.mxu0
    %507 = vst [vmem:[#allocation8] sm:$0xff] %v505
    // Predicated region
    $region54: #{tpu_custom_call.1} parent=1 // pred_check
      _
    $region55: #{tpu_custom_call.1} parent=1 // pred_check_branch
      %509 = sbr.rel (0) target = $region57
    $region56: #{tpu_custom_call.1} parent=1 // pred_region
      %511 = vsyncadd [#allocation4], 0
      %s513 = sshll.u32 [#allocation8], 4
      %s514 = int_to_ptr.vmem [resolvable:$true] %s513
      %s515 = sshll.u32 %s10, 4
      %s516 = int_to_ptr.hbm [resolvable:$true] %s515
      %518 = dma.vmem_to_hbm [thread:$0]  %s514, 128, %s516, [#allocation4]
    $region57: #{tpu_custom_call.1} parent=1 // pred_fallthru
      _
    // Predicated region
    $region58: #{tpu_custom_call.1} parent=1 // pred_check
      _
    $region59: #{tpu_custom_call.1} parent=1 // pred_check_branch
      %520 = sbr.rel (0) target = $region61
    $region60: #{tpu_custom_call.1} parent=1 // pred_region
      %522 = dma.done [#allocation4], 128
    $region61: #{tpu_custom_call.1} parent=1 // pred_fallthru
      _
    %523 = vsyncpa [#allocation3], 1
    %524 = vsyncpa [#allocation6], 1
    %525 = vsyncpa [#allocation4], 1

</llo_original>
